<compile_context>
chip_gen: v7x
topology: tpu7x:2x2x1
jax: 0.10.0
libtpu: 0.0.40
codegen_flags: <defaults>
</compile_context>

<pallas_src>
import math

import jax
import jax.numpy as jnp
from jax.experimental import pallas as pl
from jax.experimental.pallas import tpu as pltpu


def _round_up(x, m):
    return (x + m - 1) // m * m


def _cdiv(a, b):
    return (a + b - 1) // b


def _make_resblock_kernel(approximate_gelu):
    inv_sqrt2 = 1.0 / math.sqrt(2.0)

    def kernel(x_ref, w1_ref, b1_ref, w2_ref, b2_ref, o_ref, x_cast_ref,
               acc_ref=None):
        j = pl.program_id(1)                      # intermediary-dim tile index
        # f32 outputs: accumulate in-place in o_ref (resident across j).
        acc = o_ref if acc_ref is None else acc_ref

        @pl.when(j == 0)
        def _():
            # Hoist the x -> matmul-dtype cast out of the j loop (the x tile
            # is invariant over j); frees VALU slots on every iteration.
            x_cast_ref[...] = x_ref[...].astype(x_cast_ref.dtype)
            acc[...] = jnp.zeros_like(acc)

        # fc1 on the MXU (bf16 operands, f32 accumulation); bias + GELU in f32.
        h = jnp.dot(x_cast_ref[...], w1_ref[...],
                    preferred_element_type=jnp.float32) + b1_ref[...]
        if approximate_gelu:
            # tanh-approx GELU: transcendental runs on the EUP slot.
            h = jax.nn.gelu(h, approximate=True)
        else:
            # exact erf GELU, matching torch.nn.GELU() (approximate='none').
            h = 0.5 * h * (1.0 + jax.lax.erf(h * inv_sqrt2))

        # fc2 partial sum over this intermediary tile.
        acc[...] += jnp.dot(h.astype(w2_ref.dtype), w2_ref[...],
                            preferred_element_type=jnp.float32)

        @pl.when(j == pl.num_programs(1) - 1)
        def _():
            out = acc[...] + b2_ref[...] + x_ref[...].astype(jnp.float32)
            o_ref[...] = out.astype(o_ref.dtype)

    return kernel


def _vmem_budget_bytes():
    """Per-generation VMEM budget with ~25% headroom for compiler scratch."""
    cap = None
    try:
        info = pltpu.get_tpu_info()
        cap = getattr(info, "vmem_capacity_bytes", None)
    except Exception:
        cap = None
    if not cap:
        cap = 64 * 2 ** 20          # conservative fallback (v7x per-TC VMEM)
    return int(cap) * 3 // 4        # 128 MiB -> 96 MiB;  64 MiB -> 48 MiB


def _tile_footprint(tile_n, tile_inter, d_pad, xbytes, obytes, wbytes, use_acc):
    fp = 2 * tile_n * d_pad * xbytes             # x tile (double-buffered)
    fp += 2 * tile_n * d_pad * obytes            # out tile (double-buffered)
    fp += tile_n * d_pad * wbytes                # hoisted x cast scratch
    if use_acc:
        fp += tile_n * d_pad * 4                 # f32 accumulator scratch
    fp += 2 * 2 * d_pad * tile_inter * wbytes    # W1 + W2 (double-buffered)
    fp += 2 * 2 * (tile_inter + d_pad) * 4       # biases (double-buffered, f32)
    fp += tile_n * tile_inter * 4                # h intermediate (f32)
    fp += tile_n * tile_inter * wbytes           # h cast for fc2
    return fp


def _select_tiles(n, d_pad, inter, xbytes, obytes, wbytes, use_acc, budget):
    n_rounded = _round_up(max(n, 1), 8)
    inter_full = _round_up(inter, 128)
    row_cands = sorted({min(t, n_rounded)
                        for t in (1024, 512, 256, 128, 64, 32, 16, 8)},
                       reverse=True)

    # Phase A: keep the full (padded) W1/W2 resident -> weights DMA'd once for
    # the whole kernel.  Require a reasonably large row tile for MXU fill.
    min_row_for_resident = min(256, n_rounded)
    for tile_n in row_cands:
        if tile_n < min_row_for_resident:
            break
        if _tile_footprint(tile_n, inter_full, d_pad, xbytes, obytes, wbytes,
                           use_acc) <= budget:
            return tile_n, inter_full

    # Phase B: weights re-streamed per row tile -> prefer the biggest row tile
    # (arithmetic intensity per weight byte ~ tile_n FLOPs/byte).
    for tile_n in row_cands:
        for cand in (1024, 512, 256):
            tile_inter = min(cand, inter_full)
            if _tile_footprint(tile_n, tile_inter, d_pad, xbytes, obytes,
                               wbytes, use_acc) <= budget:
                return tile_n, tile_inter

    # Last resort (tiny budget): smallest tiles.
    return min(8, n_rounded), min(256, inter_full)


def resblock_forward(x, w1, b1, w2, b2, *, approximate_gelu=False):
    """x: [N, d]; w1: [d, inter]; b1: [inter]; w2: [inter, d]; b2: [d]."""
    n, d = x.shape
    inter = w1.shape[1]

    out_dtype = x.dtype
    mm_dtype = w1.dtype
    xbytes = jnp.dtype(x.dtype).itemsize
    obytes = jnp.dtype(out_dtype).itemsize
    wbytes = jnp.dtype(mm_dtype).itemsize
    use_acc = out_dtype != jnp.float32           # f32 outputs accumulate in o_ref

    budget = _vmem_budget_bytes()

    # --- pad feature dim to a lane-dense multiple of 128.  Zero padding is
    #     exact: padded x cols, W1 rows, W2 cols and b2 entries are all zero.
    d_pad = _round_up(d, 128)
    if d_pad != d:
        x = jnp.pad(x, ((0, 0), (0, d_pad - d)))
        w1 = jnp.pad(w1, ((0, d_pad - d), (0, 0)))
        w2 = jnp.pad(w2, ((0, 0), (0, d_pad - d)))
        b2 = jnp.pad(b2, ((0, d_pad - d),))

    tile_n, tile_inter = _select_tiles(n, d_pad, inter, xbytes, obytes, wbytes,
                                       use_acc, budget)

    # --- megacore guard (v7x: 2 TCs/chip).  When weights are fully resident,
    #     splitting the row axis adds no weight traffic, so keep >= 2 parallel
    #     iterations for medium/large N.
    inter_full = _round_up(inter, 128)
    n_rounded = _round_up(max(n, 1), 8)
    if tile_inter == inter_full and n >= 256 and tile_n >= n_rounded:
        tile_n = _round_up(_cdiv(n_rounded, 2), 8)

    # --- row (M) padding/tiling.
    n_pad = _round_up(n, tile_n)
    if n_pad != n:
        x = jnp.pad(x, ((0, n_pad - n), (0, 0)))

    # --- intermediary-dim padding/tiling.  Zero padding is exact:
    #     gelu(x@0 + 0) == 0, and padded W2 rows are zero.
    inter_pad = _round_up(inter, tile_inter)
    if inter_pad != inter:
        w1 = jnp.pad(w1, ((0, 0), (0, inter_pad - inter)))
        b1 = jnp.pad(b1, ((0, inter_pad - inter),))
        w2 = jnp.pad(w2, ((0, inter_pad - inter), (0, 0)))

    b1_2d = b1.reshape(1, inter_pad).astype(jnp.float32)
    b2_2d = b2.reshape(1, d_pad).astype(jnp.float32)

    grid = (n_pad // tile_n, inter_pad // tile_inter)
    weights_resident = grid[1] == 1              # W block index constant -> one DMA total

    footprint = _tile_footprint(tile_n, tile_inter, d_pad, xbytes, obytes,
                                wbytes, use_acc)
    vmem_limit = int(max(budget, footprint * 5 // 4)) if footprint > budget \
        else int(budget)

    weight_streams = 1 if weights_resident else grid[0]
    cost = pl.CostEstimate(
        flops=2 * 2 * n_pad * d_pad * inter_pad,            # two matmuls
        transcendentals=n_pad * inter_pad,                   # erf / tanh
        bytes_accessed=(n_pad * d_pad * (xbytes + obytes)    # x in + out
                        + weight_streams * 2 * d_pad * inter_pad * wbytes
                        + (inter_pad + d_pad) * 4),          # biases
    )

    scratch = [pltpu.VMEM((tile_n, d_pad), mm_dtype)]        # hoisted x cast
    if use_acc:
        scratch.append(pltpu.VMEM((tile_n, d_pad), jnp.float32))

    kernel = _make_resblock_kernel(approximate_gelu)

    # TODO(synk): optionally sweep pipeline_mode=pl.Buffered(3) on the W1/W2
    # specs for v5e when grid[1] > 1 (weight-DMA latency hiding at small d).
    out = pl.pallas_call(
        kernel,
        out_shape=jax.ShapeDtypeStruct((n_pad, d_pad), out_dtype),
        grid_spec=pltpu.PrefetchScalarGridSpec(
            num_scalar_prefetch=0,
            grid=grid,
            in_specs=[
                pl.BlockSpec((tile_n, d_pad), lambda i, j: (i, 0)),       # x
                pl.BlockSpec((d_pad, tile_inter), lambda i, j: (0, j)),   # W1
                pl.BlockSpec((1, tile_inter), lambda i, j: (0, j)),       # b1
                pl.BlockSpec((tile_inter, d_pad), lambda i, j: (j, 0)),   # W2
                pl.BlockSpec((1, d_pad), lambda i, j: (0, 0)),            # b2
            ],
            out_specs=pl.BlockSpec((tile_n, d_pad), lambda i, j: (i, 0)),
            scratch_shapes=scratch,
        ),
        compiler_params=pltpu.CompilerParams(
            dimension_semantics=("parallel", "arbitrary"),
            vmem_limit_bytes=vmem_limit,
        ),
        cost_estimate=cost,
    )(x, w1, b1_2d, w2, b2_2d)

    if n_pad != n or d_pad != d:
        out = out[:n, :d]
    return out


class ResBlockPallas:
    """JAX/Pallas equivalent of the PyTorch ResBlock (fc1 -> GELU -> fc2 -> +x).

    Note: weights are stored bf16 by default (matmul operands on the MXU) —
    an intentional, documented deviation from the fp32 PyTorch module.  Bias,
    GELU, residual and accumulation stay f32.  Pass param_dtype=jnp.float32
    for full-precision parity.
    """

    def __init__(self, start_dim, intermediary_dim, key, param_dtype=jnp.bfloat16):
        k1, k2, k3, k4 = jax.random.split(key, 4)
        # PyTorch Linear default init bound 1/sqrt(fan_in)
        bound1 = 1.0 / math.sqrt(start_dim)
        bound2 = 1.0 / math.sqrt(intermediary_dim)
        # Weights stored transposed [in, out].
        self.w1 = jax.random.uniform(k1, (start_dim, intermediary_dim),
                                     jnp.float32, -bound1, bound1).astype(param_dtype)
        self.b1 = jax.random.uniform(k2, (intermediary_dim,),
                                     jnp.float32, -bound1, bound1)
        self.w2 = jax.random.uniform(k3, (intermediary_dim, start_dim),
                                     jnp.float32, -bound2, bound2).astype(param_dtype)
        self.b2 = jax.random.uniform(k4, (start_dim,),
                                     jnp.float32, -bound2, bound2)

    def __call__(self, x, *, approximate_gelu=False):
        # x may be [..., start_dim]; flatten leading dims like nn.Linear does.
        lead_shape = x.shape[:-1]
        d = x.shape[-1]
        x2 = x.reshape(-1, d)
        out = resblock_forward(x2, self.w1, self.b1, self.w2, self.b2,
                               approximate_gelu=approximate_gelu)
        return out.reshape(*lead_shape, d)


def _reference(x, w1, b1, w2, b2):
    """Pure-JAX reference with the same bf16 matmul-operand casts as the kernel."""
    mm = w1.dtype
    h = jnp.dot(x.astype(mm), w1, preferred_element_type=jnp.float32) \
        + b1.astype(jnp.float32)
    h = 0.5 * h * (1.0 + jax.lax.erf(h * (1.0 / math.sqrt(2.0))))
    out = jnp.dot(h.astype(w2.dtype), w2, preferred_element_type=jnp.float32) \
        + b2.astype(jnp.float32)
    return out + x


if __name__ == "__main__":
    key = jax.random.PRNGKey(0)
    k_param, k_x = jax.random.split(key)

    start_dim, intermediary_dim = 32, 64
    batch, seq = 2, 8

    block = ResBlockPallas(start_dim, intermediary_dim, k_param)
    x = jax.random.normal(k_x, (batch, seq, start_dim), jnp.float32)

    out = jax.block_until_ready(block(x))

    ref = _reference(x.reshape(-1, start_dim), block.w1, block.b1,
                     block.w2, block.b2).reshape(batch, seq, start_dim)
    assert out.shape == x.shape
    assert jnp.allclose(out, ref, atol=1e-2, rtol=1e-2), "mismatch vs reference"

    print("KERNEL_OK")
</pallas_src>

<mosaic_0001>
module attributes {stable_mosaic.version = 11 : i64} {
  func.func @kernel(%arg0: i32, %arg1: i32, %arg2: memref<16x128xf32, #tpu.memory_space<vmem>>, %arg3: memref<128x128xbf16, #tpu.memory_space<vmem>>, %arg4: memref<1x128xf32, #tpu.memory_space<vmem>>, %arg5: memref<128x128xbf16, #tpu.memory_space<vmem>>, %arg6: memref<1x128xf32, #tpu.memory_space<vmem>>, %arg7: memref<16x128xf32, #tpu.memory_space<vmem>>, %arg8: memref<16x128xbf16, #tpu.memory_space<vmem>>) attributes {dimension_semantics = [#tpu.dimension_semantics<parallel>, #tpu.dimension_semantics<arbitrary>], iteration_bounds = array<i64: 1, 1>, scalar_prefetch = 0 : i64, scratch_operands = 1 : i64, tpu.core_type = #tpu.core_type<tc>, window_params = [{transform_indices = @transform_0, window_bounds = array<i64: 16, 128>}, {transform_indices = @transform_1, window_bounds = array<i64: 128, 128>}, {transform_indices = @transform_2, window_bounds = array<i64: 1, 128>}, {transform_indices = @transform_3, window_bounds = array<i64: 128, 128>}, {pipeline_mode = #tpu.pipeline_mode<synchronous>, transform_indices = @transform_4, window_bounds = array<i64: 1, 128>}, {transform_indices = @transform_5, window_bounds = array<i64: 16, 128>}]} {
    %c0_i32 = arith.constant 0 : i32
    %0 = arith.cmpi eq, %arg1, %c0_i32 : i32
    %1 = arith.extui %0 : i1 to i32
    %c0_i32_0 = arith.constant 0 : i32
    %2 = arith.cmpi ne, %1, %c0_i32_0 : i32
    scf.if %2 {
      %c0_18 = arith.constant 0 : index
      %c0_19 = arith.constant 0 : index
      %26 = vector.load %arg2[%c0_18, %c0_19] : memref<16x128xf32, #tpu.memory_space<vmem>>, vector<16x128xf32>
      %27 = arith.truncf %26 : vector<16x128xf32> to vector<16x128xbf16>
      %c0_20 = arith.constant 0 : index
      %c0_21 = arith.constant 0 : index
      %28 = vector.load %arg8[%c0_20, %c0_21] : memref<16x128xbf16, #tpu.memory_space<vmem>>, vector<16x128xbf16>
      tpu.vector_store %arg8[%c0_20, %c0_21], %27 {strides = array<i32>} : memref<16x128xbf16, #tpu.memory_space<vmem>>, vector<16x128xbf16>,
      %cst_22 = arith.constant 0.000000e+00 : f32
      %29 = vector.broadcast %cst_22 : f32 to vector<16x128xf32>
      %c0_23 = arith.constant 0 : index
      %c0_24 = arith.constant 0 : index
      %30 = vector.load %arg7[%c0_23, %c0_24] : memref<16x128xf32, #tpu.memory_space<vmem>>, vector<16x128xf32>
      tpu.vector_store %arg7[%c0_23, %c0_24], %29 {strides = array<i32>} : memref<16x128xf32, #tpu.memory_space<vmem>>, vector<16x128xf32>,
    } else {
    }
    %c0 = arith.constant 0 : index
    %c0_1 = arith.constant 0 : index
    %3 = vector.load %arg8[%c0, %c0_1] : memref<16x128xbf16, #tpu.memory_space<vmem>>, vector<16x128xbf16>
    %c0_2 = arith.constant 0 : index
    %c0_3 = arith.constant 0 : index
    %4 = vector.load %arg3[%c0_2, %c0_3] : memref<128x128xbf16, #tpu.memory_space<vmem>>, vector<128x128xbf16>
    %cst = arith.constant dense<0.000000e+00> : vector<16x128xf32>
    %5 = tpu.matmul %3, %4, %cst {dimension_numbers = #tpu.dot_dimension_numbers<[1], [0], [0], [1], [0, 0, 1, 1], [], []>} : vector<16x128xbf16>, vector<128x128xbf16>, vector<16x128xf32> -> vector<16x128xf32>
    %c0_4 = arith.constant 0 : index
    %c0_5 = arith.constant 0 : index
    %6 = vector.load %arg4[%c0_4, %c0_5] : memref<1x128xf32, #tpu.memory_space<vmem>>, vector<1x128xf32>
    %7 = vector.broadcast %6 : vector<1x128xf32> to vector<16x128xf32>
    %8 = arith.addf %5, %7 : vector<16x128xf32>
    %cst_6 = arith.constant 5.000000e-01 : f32
    %9 = vector.broadcast %cst_6 : f32 to vector<16x128xf32>
    %10 = arith.mulf %9, %8 : vector<16x128xf32>
    %cst_7 = arith.constant 0.707106769 : f32
    %11 = vector.broadcast %cst_7 : f32 to vector<16x128xf32>
    %12 = arith.mulf %8, %11 : vector<16x128xf32>
    %13 = math.erf %12 : vector<16x128xf32>
    %cst_8 = arith.constant 1.000000e+00 : f32
    %14 = vector.broadcast %cst_8 : f32 to vector<16x128xf32>
    %15 = arith.addf %14, %13 : vector<16x128xf32>
    %16 = arith.mulf %10, %15 : vector<16x128xf32>
    %c0_9 = arith.constant 0 : index
    %c0_10 = arith.constant 0 : index
    %17 = vector.load %arg7[%c0_9, %c0_10] : memref<16x128xf32, #tpu.memory_space<vmem>>, vector<16x128xf32>
    %18 = arith.truncf %16 : vector<16x128xf32> to vector<16x128xbf16>
    %c0_11 = arith.constant 0 : index
    %c0_12 = arith.constant 0 : index
    %19 = vector.load %arg5[%c0_11, %c0_12] : memref<128x128xbf16, #tpu.memory_space<vmem>>, vector<128x128xbf16>
    %cst_13 = arith.constant dense<0.000000e+00> : vector<16x128xf32>
    %20 = tpu.matmul %18, %19, %cst_13 {dimension_numbers = #tpu.dot_dimension_numbers<[1], [0], [0], [1], [0, 0, 1, 1], [], []>} : vector<16x128xbf16>, vector<128x128xbf16>, vector<16x128xf32> -> vector<16x128xf32>
    %21 = arith.addf %17, %20 : vector<16x128xf32>
    %c0_14 = arith.constant 0 : index
    %c0_15 = arith.constant 0 : index
    %22 = vector.load %arg7[%c0_14, %c0_15] : memref<16x128xf32, #tpu.memory_space<vmem>>, vector<16x128xf32>
    tpu.vector_store %arg7[%c0_14, %c0_15], %21 {strides = array<i32>} : memref<16x128xf32, #tpu.memory_space<vmem>>, vector<16x128xf32>,
    %c0_i32_16 = arith.constant 0 : i32
    %23 = arith.cmpi eq, %arg1, %c0_i32_16 : i32
    %24 = arith.extui %23 : i1 to i32
    %c0_i32_17 = arith.constant 0 : i32
    %25 = arith.cmpi ne, %24, %c0_i32_17 : i32
    scf.if %25 {
      %c0_18 = arith.constant 0 : index
      %c0_19 = arith.constant 0 : index
      %26 = vector.load %arg7[%c0_18, %c0_19] : memref<16x128xf32, #tpu.memory_space<vmem>>, vector<16x128xf32>
      %c0_20 = arith.constant 0 : index
      %c0_21 = arith.constant 0 : index
      %27 = vector.load %arg6[%c0_20, %c0_21] : memref<1x128xf32, #tpu.memory_space<vmem>>, vector<1x128xf32>
      %28 = vector.broadcast %27 : vector<1x128xf32> to vector<16x128xf32>
      %29 = arith.addf %26, %28 : vector<16x128xf32>
      %c0_22 = arith.constant 0 : index
      %c0_23 = arith.constant 0 : index
      %30 = vector.load %arg2[%c0_22, %c0_23] : memref<16x128xf32, #tpu.memory_space<vmem>>, vector<16x128xf32>
      %31 = arith.addf %29, %30 : vector<16x128xf32>
      %c0_24 = arith.constant 0 : index
      %c0_25 = arith.constant 0 : index
      %32 = vector.load %arg7[%c0_24, %c0_25] : memref<16x128xf32, #tpu.memory_space<vmem>>, vector<16x128xf32>
      tpu.vector_store %arg7[%c0_24, %c0_25], %31 {strides = array<i32>} : memref<16x128xf32, #tpu.memory_space<vmem>>, vector<16x128xf32>,
    } else {
    }
    return
  }
  func.func @transform_0(%arg0: i32, %arg1: i32) -> (i32, i32) {
    %c0_i32 = arith.constant 0 : i32
    %c0_i32_0 = arith.constant 0 : i32
    return %arg0, %c0_i32 : i32, i32
  }
  func.func @transform_1(%arg0: i32, %arg1: i32) -> (i32, i32) {
    %c0_i32 = arith.constant 0 : i32
    %c0_i32_0 = arith.constant 0 : i32
    return %c0_i32, %arg1 : i32, i32
  }
  func.func @transform_2(%arg0: i32, %arg1: i32) -> (i32, i32) {
    %c0_i32 = arith.constant 0 : i32
    %c0_i32_0 = arith.constant 0 : i32
    return %c0_i32, %arg1 : i32, i32
  }
  func.func @transform_3(%arg0: i32, %arg1: i32) -> (i32, i32) {
    %c0_i32 = arith.constant 0 : i32
    %c0_i32_0 = arith.constant 0 : i32
    return %arg1, %c0_i32 : i32, i32
  }
  func.func @transform_4(%arg0: i32, %arg1: i32) -> (i32, i32) {
    %c0_i32 = arith.constant 0 : i32
    %c0_i32_0 = arith.constant 0 : i32
    %c0_i32_1 = arith.constant 0 : i32
    return %c0_i32, %c0_i32_0 : i32, i32
  }
  func.func @transform_5(%arg0: i32, %arg1: i32) -> (i32, i32) {
    %c0_i32 = arith.constant 0 : i32
    %c0_i32_0 = arith.constant 0 : i32
    return %arg0, %c0_i32 : i32, i32
  }
}

</mosaic_0001>

<llo_original>
// kernel: tpu_custom_call.1
$region0: #{tpu_custom_call.1}
  #allocation0 [shape = 'u32[]', space=smem, size = 0x4, offset = 0x4, fixed_abs, tag = 'smem constant byte address 0x4 - core index']
  #allocation1 [shape = 'u32[144,128]{1,0:T(1,128)}', space=vmem, size = 0x12000, scoped, tag = 'internal scratch']
  #allocation2 [shape = 'bf16[16,128]{1,0:T(16,128)(2,1)}', space=vmem, size = 0x1000, scoped, tag = 'scratch operand']
  %s0 = inlined_call_operand.hbm [shape: f32[16,128], index: 0, kind: input, shape index: {}]
  %s1 = inlined_call_operand.hbm [shape: bf16[128,128], index: 1, kind: input, shape index: {}]
  %s2 = inlined_call_operand.vmem [shape: f32[1,128], index: 2, kind: input, shape index: {}]
  %s3 = inlined_call_operand.hbm [shape: bf16[128,128], index: 3, kind: input, shape index: {}]
  %s4 = inlined_call_operand.vmem [shape: f32[1,128], index: 4, kind: input, shape index: {}]
  %s5 = inlined_call_operand.hbm [shape: f32[16,128], index: 5, kind: output, shape index: {}]
  %s6 = sld [smem:[#allocation0]]
  $region50: #{tpu_custom_call.1} parent=0
    _
  %s8 = ssub.s32 1, %s6
  %s9 = scalar_select 0, %s8, %s6
  $region1: #{tpu_custom_call.1} parent=0
    #allocation3 [shape = 'u8[8192]{0}', space=vmem, size = 0x2000, scoped, tag = 'input window, operand 0, single buffered']
    #allocation4 [shape = 's32[1]{0}', space=sflag, size = 0x4, scoped, tag = 'scoped memory for tpu_custom_call.1']
    #allocation5 [shape = 's32[1]{0}', space=sflag, size = 0x4, scoped, tag = 'scoped memory for tpu_custom_call.1']
    #allocation6 [shape = 'u8[32768]{0}', space=vmem, size = 0x8000, scoped, tag = 'input window, operand 1, single buffered']
    #allocation7 [shape = 's32[1]{0}', space=sflag, size = 0x4, scoped, tag = 'scoped memory for tpu_custom_call.1']
    #allocation8 [shape = 'u8[32768]{0}', space=vmem, size = 0x8000, scoped, tag = 'input window, operand 3, single buffered']
    #allocation9 [shape = 'u8[8192]{0}', space=vmem, size = 0x2000, scoped, tag = 'output window, operand 0, single buffered']
    %10 = vsyncpa [#allocation4], 0
    %11 = vsyncpa [#allocation7], 0
    %12 = vsyncpa [#allocation5], 0
    // Predicated region
    $region2: #{tpu_custom_call.1} parent=1 // pred_check
      _
    $region3: #{tpu_custom_call.1} parent=1 // pred_check_branch
      %14 = sbr.rel (0) target = $region5
    $region4: #{tpu_custom_call.1} parent=1 // pred_region
      %s16 = ssub.s32 256, 256
      %17 = vsyncadd [#allocation4], %s16
      %s18 = sshll.u32 [#allocation3], 4
      %s19 = int_to_ptr.vmem [resolvable:$true] %s18
      %24 = dma.hbm_to_vmem [thread:$0]  %s0, 256, %s19, [#allocation4], 128, 128, 8
    $region5: #{tpu_custom_call.1} parent=1 // pred_fallthru
      _
    // Predicated region
    $region6: #{tpu_custom_call.1} parent=1 // pred_check
      _
    $region7: #{tpu_custom_call.1} parent=1 // pred_check_branch
      %26 = sbr.rel (0) target = $region9
    $region8: #{tpu_custom_call.1} parent=1 // pred_region
      %s28 = ssub.s32 1024, 1024
      %29 = vsyncadd [#allocation7], %s28
      %s30 = sshll.u32 [#allocation6], 4
      %s31 = int_to_ptr.vmem [resolvable:$true] %s30
      %36 = dma.hbm_to_vmem [thread:$0]  %s1, 1024, %s31, [#allocation7], 64, 64, 4
    $region9: #{tpu_custom_call.1} parent=1 // pred_fallthru
      _
    // Predicated region
    $region10: #{tpu_custom_call.1} parent=1 // pred_check
      _
    $region11: #{tpu_custom_call.1} parent=1 // pred_check_branch
      %38 = sbr.rel (0) target = $region13
    $region12: #{tpu_custom_call.1} parent=1 // pred_region
      _
    $region13: #{tpu_custom_call.1} parent=1 // pred_fallthru
      _
    // Predicated region
    $region14: #{tpu_custom_call.1} parent=1 // pred_check
      _
    $region15: #{tpu_custom_call.1} parent=1 // pred_check_branch
      %40 = sbr.rel (0) target = $region17
    $region16: #{tpu_custom_call.1} parent=1 // pred_region
      %s42 = ssub.s32 1024, 1024
      %43 = vsyncadd [#allocation7], %s42
      %s44 = sshll.u32 [#allocation8], 4
      %s45 = int_to_ptr.vmem [resolvable:$true] %s44
      %50 = dma.hbm_to_vmem [thread:$0]  %s3, 1024, %s45, [#allocation7], 64, 64, 4
    $region17: #{tpu_custom_call.1} parent=1 // pred_fallthru
      _
    // Predicated region
    $region18: #{tpu_custom_call.1} parent=1 // pred_check
      _
    $region19: #{tpu_custom_call.1} parent=1 // pred_check_branch
      %52 = sbr.rel (0) target = $region21
    $region20: #{tpu_custom_call.1} parent=1 // pred_region
      _
    $region21: #{tpu_custom_call.1} parent=1 // pred_fallthru
      _
    // Predicated region
    $region22: #{tpu_custom_call.1} parent=1 // pred_check
      _
    $region23: #{tpu_custom_call.1} parent=1 // pred_check_branch
      %54 = sbr.rel (0) target = $region25
    $region24: #{tpu_custom_call.1} parent=1 // pred_region
      %55 = dma.done [#allocation4], 256
    $region25: #{tpu_custom_call.1} parent=1 // pred_fallthru
      _
    // Predicated region
    $region26: #{tpu_custom_call.1} parent=1 // pred_check
      _
    $region27: #{tpu_custom_call.1} parent=1 // pred_check_branch
      %57 = sbr.rel (0) target = $region29
    $region28: #{tpu_custom_call.1} parent=1 // pred_region
      %58 = dma.done [#allocation7], 1024
    $region29: #{tpu_custom_call.1} parent=1 // pred_fallthru
      _
    // Predicated region
    $region30: #{tpu_custom_call.1} parent=1 // pred_check
      _
    $region31: #{tpu_custom_call.1} parent=1 // pred_check_branch
      %60 = sbr.rel (0) target = $region33
    $region32: #{tpu_custom_call.1} parent=1 // pred_region
      %61 = dma.done [#allocation7], 1024
    $region33: #{tpu_custom_call.1} parent=1 // pred_fallthru
      _
    %p63 = scmp.eq.s32.totalorder 0, 0
    // Predicated region
    $region34: #{tpu_custom_call.1} parent=1 // pred_check
      %p64 = pneg %p63
    $region35: #{tpu_custom_call.1} parent=1 // pred_check_branch
      %66 = sbr.rel (%p64) target = $region37
    $region36: #{tpu_custom_call.1} parent=1 // pred_region
      %v67 = vld [vmem:[#allocation3] sm:$0xff]
      %v68 = vld [vmem:[#allocation3 + $0x8] sm:$0xff]
      %v69 = vpack.c.bf16 %v68, %v67
      %70 = vst [vmem:[#allocation2] sm:$0xff] %v69
      %71 = vst [vmem:[#allocation9] sm:$0xff] 0.0
      %72 = vst [vmem:[#allocation9 + $0x8] sm:$0xff] 0.0
    $region37: #{tpu_custom_call.1} parent=1 // pred_fallthru
      _
    %v73 = vld [vmem:[#allocation2] sm:$0xff]
    %v74 = vld [vmem:[#allocation6] sm:$0xf]
    %v75 = vld [vmem:[#allocation6 + $0x4] sm:$0xf]
    %v76 = vld [vmem:[#allocation6 + $0x8] sm:$0xf]
    %v77 = vld [vmem:[#allocation6 + $0xc] sm:$0xf]
    %v78 = vld [vmem:[#allocation6 + $0x10] sm:$0xf]
    %v79 = vld [vmem:[#allocation6 + $0x14] sm:$0xf]
    %v80 = vld [vmem:[#allocation6 + $0x18] sm:$0xf]
    %v81 = vld [vmem:[#allocation6 + $0x1c] sm:$0xf]
    %v82 = vld [vmem:[#allocation6 + $0x20] sm:$0xf]
    %v83 = vld [vmem:[#allocation6 + $0x24] sm:$0xf]
    %v84 = vld [vmem:[#allocation6 + $0x28] sm:$0xf]
    %v85 = vld [vmem:[#allocation6 + $0x2c] sm:$0xf]
    %v86 = vld [vmem:[#allocation6 + $0x30] sm:$0xf]
    %v87 = vld [vmem:[#allocation6 + $0x34] sm:$0xf]
    %v88 = vld [vmem:[#allocation6 + $0x38] sm:$0xf]
    %v89 = vld [vmem:[#allocation6 + $0x3c] sm:$0xf]
    %v90 = vld [vmem:[%s2] sm:$0x1]
    %v92 = vlaneseq
    %v93 = vshrl.u32 %v92, 7
    %v94 = vsub.s32 0, %v93
    %v95 = vrot.slane %v90, %v94
    %v113 = vunpack.c.l.b16 %v74
    %v114 = vunpack.c.l.b16 %v75
    %v115 = vunpack.c.l.b16 %v76
    %v116 = vunpack.c.l.b16 %v77
    %v117 = vunpack.c.l.b16 %v78
    %v118 = vunpack.c.l.b16 %v79
    %v119 = vunpack.c.l.b16 %v80
    %v120 = vunpack.c.l.b16 %v81
    %v121 = vunpack.c.l.b16 %v82
    %v122 = vunpack.c.l.b16 %v83
    %v123 = vunpack.c.l.b16 %v84
    %v124 = vunpack.c.l.b16 %v85
    %v125 = vunpack.c.l.b16 %v86
    %v126 = vunpack.c.l.b16 %v87
    %v127 = vunpack.c.l.b16 %v88
    %v128 = vunpack.c.l.b16 %v89
    %v129 = vpack.c.b16 %v114, %v113
    %v130 = vpack.c.b16 %v116, %v115
    %v131 = vpack.c.b16 %v118, %v117
    %v132 = vpack.c.b16 %v120, %v119
    %v133 = vpack.c.b16 %v122, %v121
    %v134 = vpack.c.b16 %v124, %v123
    %v135 = vpack.c.b16 %v126, %v125
    %v136 = vpack.c.b16 %v128, %v127
    %145 = vmatprep.subr.bf16.mxu0 0
    %146 = vmatpush1.bf16.msra.mxu0 %v129
    %147 = vmatprep.subr.bf16.mxu0 0
    %148 = vmatpush1.bf16.msra.mxu0 %v130
    %149 = vmatprep.subr.bf16.mxu0 0
    %150 = vmatpush1.bf16.msra.mxu0 %v131
    %151 = vmatprep.subr.bf16.mxu0 0
    %152 = vmatpush1.bf16.msra.mxu0 %v132
    %153 = vmatprep.subr.bf16.mxu0 0
    %154 = vmatpush1.bf16.msra.mxu0 %v133
    %155 = vmatprep.subr.bf16.mxu0 0
    %156 = vmatpush1.bf16.msra.mxu0 %v134
    %157 = vmatprep.subr.bf16.mxu0 0
    %158 = vmatpush1.bf16.msra.mxu0 %v135
    %159 = vmatprep.subr.bf16.mxu0 0
    %160 = vmatpush1.bf16.msra.mxu0 %v136
    %161 = vmatprep.subr.bf16.mxu0 0
    %162 = vmatpush1.bf16.msra.mxu0 0
    %163 = vmatprep.subr.bf16.mxu0 0
    %164 = vmatpush1.bf16.msra.mxu0 0
    %165 = vmatprep.subr.bf16.mxu0 0
    %166 = vmatpush1.bf16.msra.mxu0 0
    %167 = vmatprep.subr.bf16.mxu0 0
    %168 = vmatpush1.bf16.msra.mxu0 0
    %169 = vmatprep.subr.bf16.mxu0 0
    %170 = vmatpush1.bf16.msra.mxu0 0
    %171 = vmatprep.subr.bf16.mxu0 0
    %172 = vmatpush1.bf16.msra.mxu0 0
    %173 = vmatprep.subr.bf16.mxu0 0
    %174 = vmatpush1.bf16.msra.mxu0 0
    %175 = vmatprep.subr.bf16.mxu0 0
    %176 = vmatpush1.bf16.msra.mxu0 0
    %177 = vmatprep.mubr.bf16.mxu0 0
    %178 = vmatmul.mubr.bf16.gmra.mrb[0].mxu0 %v73
    %v179 = vpop.f32.mrb[0].mxu0
    %v180 = vadd.f32 %v95, %v179
    %v181 = vpop.f32.mrb[0].mxu0
    %v182 = vpop.f32.mrb[0].mxu0
    %v183 = vadd.f32 %v95, %v182
    %v184 = vpop.f32.mrb[0].mxu0
    %185 = vdwg.mxu0
    %v186 = vmul.f32 %v180, 0.5
    %v187 = vmul.f32 %v183, 0.5
    %v188 = vmul.f32 %v180, 0.70710677
    %v189 = vmul.f32 %v183, 0.70710677
    %v190 = verf.f32.pop %v188
    %v191 = verf.f32.pop %v189
    %v192 = vadd.f32 %v190, 1.0
    %v193 = vadd.f32 %v191, 1.0
    %v194 = vmul.f32 %v186, %v192
    %v195 = vmul.f32 %v187, %v193
    %v196 = vld [vmem:[#allocation9] sm:$0xff]
    %v197 = vld [vmem:[#allocation9 + $0x8] sm:$0xff]
    %v198 = vpack.c.bf16 %v195, %v194
    %v199 = vld [vmem:[#allocation8] sm:$0xf]
    %v200 = vld [vmem:[#allocation8 + $0x4] sm:$0xf]
    %v201 = vld [vmem:[#allocation8 + $0x8] sm:$0xf]
    %v202 = vld [vmem:[#allocation8 + $0xc] sm:$0xf]
    %v203 = vld [vmem:[#allocation8 + $0x10] sm:$0xf]
    %v204 = vld [vmem:[#allocation8 + $0x14] sm:$0xf]
    %v205 = vld [vmem:[#allocation8 + $0x18] sm:$0xf]
    %v206 = vld [vmem:[#allocation8 + $0x1c] sm:$0xf]
    %v207 = vld [vmem:[#allocation8 + $0x20] sm:$0xf]
    %v208 = vld [vmem:[#allocation8 + $0x24] sm:$0xf]
    %v209 = vld [vmem:[#allocation8 + $0x28] sm:$0xf]
    %v210 = vld [vmem:[#allocation8 + $0x2c] sm:$0xf]
    %v211 = vld [vmem:[#allocation8 + $0x30] sm:$0xf]
    %v212 = vld [vmem:[#allocation8 + $0x34] sm:$0xf]
    %v213 = vld [vmem:[#allocation8 + $0x38] sm:$0xf]
    %v214 = vld [vmem:[#allocation8 + $0x3c] sm:$0xf]
    %v231 = vunpack.c.l.b16 %v199
    %v232 = vunpack.c.l.b16 %v200
    %v233 = vunpack.c.l.b16 %v201
    %v234 = vunpack.c.l.b16 %v202
    %v235 = vunpack.c.l.b16 %v203
    %v236 = vunpack.c.l.b16 %v204
    %v237 = vunpack.c.l.b16 %v205
    %v238 = vunpack.c.l.b16 %v206
    %v239 = vunpack.c.l.b16 %v207
    %v240 = vunpack.c.l.b16 %v208
    %v241 = vunpack.c.l.b16 %v209
    %v242 = vunpack.c.l.b16 %v210
    %v243 = vunpack.c.l.b16 %v211
    %v244 = vunpack.c.l.b16 %v212
    %v245 = vunpack.c.l.b16 %v213
    %v246 = vunpack.c.l.b16 %v214
    %v247 = vpack.c.b16 %v232, %v231
    %v248 = vpack.c.b16 %v234, %v233
    %v249 = vpack.c.b16 %v236, %v235
    %v250 = vpack.c.b16 %v238, %v237
    %v251 = vpack.c.b16 %v240, %v239
    %v252 = vpack.c.b16 %v242, %v241
    %v253 = vpack.c.b16 %v244, %v243
    %v254 = vpack.c.b16 %v246, %v245
    %263 = vmatprep.subr.bf16.mxu0 0
    %264 = vmatpush1.bf16.msra.mxu0 %v247
    %265 = vmatprep.subr.bf16.mxu0 0
    %266 = vmatpush1.bf16.msra.mxu0 %v248
    %267 = vmatprep.subr.bf16.mxu0 0
    %268 = vmatpush1.bf16.msra.mxu0 %v249
    %269 = vmatprep.subr.bf16.mxu0 0
    %270 = vmatpush1.bf16.msra.mxu0 %v250
    %271 = vmatprep.subr.bf16.mxu0 0
    %272 = vmatpush1.bf16.msra.mxu0 %v251
    %273 = vmatprep.subr.bf16.mxu0 0
    %274 = vmatpush1.bf16.msra.mxu0 %v252
    %275 = vmatprep.subr.bf16.mxu0 0
    %276 = vmatpush1.bf16.msra.mxu0 %v253
    %277 = vmatprep.subr.bf16.mxu0 0
    %278 = vmatpush1.bf16.msra.mxu0 %v254
    %279 = vmatprep.subr.bf16.mxu0 0
    %280 = vmatpush1.bf16.msra.mxu0 0
    %281 = vmatprep.subr.bf16.mxu0 0
    %282 = vmatpush1.bf16.msra.mxu0 0
    %283 = vmatprep.subr.bf16.mxu0 0
    %284 = vmatpush1.bf16.msra.mxu0 0
    %285 = vmatprep.subr.bf16.mxu0 0
    %286 = vmatpush1.bf16.msra.mxu0 0
    %287 = vmatprep.subr.bf16.mxu0 0
    %288 = vmatpush1.bf16.msra.mxu0 0
    %289 = vmatprep.subr.bf16.mxu0 0
    %290 = vmatpush1.bf16.msra.mxu0 0
    %291 = vmatprep.subr.bf16.mxu0 0
    %292 = vmatpush1.bf16.msra.mxu0 0
    %293 = vmatprep.subr.bf16.mxu0 0
    %294 = vmatpush1.bf16.msra.mxu0 0
    %295 = vmatprep.mubr.bf16.mxu0 0
    %296 = vmatmul.mubr.bf16.gmra.mrb[0].mxu0 %v198
    %v297 = vpop.f32.mrb[0].mxu0
    %v298 = vadd.f32 0.0, %v297
    %v299 = vpop.f32.mrb[0].mxu0
    %v300 = vpop.f32.mrb[0].mxu0
    %v301 = vadd.f32 0.0, %v300
    %v302 = vpop.f32.mrb[0].mxu0
    %303 = vdwg.mxu0
    %v304 = vadd.f32 %v196, %v298
    %v305 = vadd.f32 %v197, %v301
    %306 = vst [vmem:[#allocation9] sm:$0xff] %v304
    %307 = vst [vmem:[#allocation9 + $0x8] sm:$0xff] %v305
    // Predicated region
    $region38: #{tpu_custom_call.1} parent=1 // pred_check
      %p308 = pneg %p63
    $region39: #{tpu_custom_call.1} parent=1 // pred_check_branch
      %310 = sbr.rel (%p308) target = $region41
    $region40: #{tpu_custom_call.1} parent=1 // pred_region
      %v311 = vld [vmem:[#allocation9] sm:$0xff]
      %v312 = vld [vmem:[#allocation9 + $0x8] sm:$0xff]
      %v313 = vld [vmem:[%s4] sm:$0x1]
      %v315 = vlaneseq
      %v316 = vshrl.u32 %v315, 7
      %v317 = vsub.s32 0, %v316
      %v318 = vrot.slane %v313, %v317
      %v320 = vadd.f32 %v311, %v318
      %v321 = vadd.f32 %v312, %v318
      %v322 = vld [vmem:[#allocation3] sm:$0xff]
      %v323 = vld [vmem:[#allocation3 + $0x8] sm:$0xff]
      %v324 = vadd.f32 %v320, %v322
      %v325 = vadd.f32 %v321, %v323
      %326 = vst [vmem:[#allocation9] sm:$0xff] %v324
      %327 = vst [vmem:[#allocation9 + $0x8] sm:$0xff] %v325
    $region41: #{tpu_custom_call.1} parent=1 // pred_fallthru
      _
    // Predicated region
    $region42: #{tpu_custom_call.1} parent=1 // pred_check
      _
    $region43: #{tpu_custom_call.1} parent=1 // pred_check_branch
      %329 = sbr.rel (0) target = $region45
    $region44: #{tpu_custom_call.1} parent=1 // pred_region
      %s331 = ssub.s32 256, 256
      %332 = vsyncadd [#allocation5], %s331
      %s333 = sshll.u32 [#allocation9], 4
      %s334 = int_to_ptr.vmem [resolvable:$true] %s333
      %339 = dma.vmem_to_hbm [thread:$0]  %s334, 256, %s5, [#allocation5], 128, 128, 8
    $region45: #{tpu_custom_call.1} parent=1 // pred_fallthru
      _
    // Predicated region
    $region46: #{tpu_custom_call.1} parent=1 // pred_check
      _
    $region47: #{tpu_custom_call.1} parent=1 // pred_check_branch
      %341 = sbr.rel (0) target = $region49
    $region48: #{tpu_custom_call.1} parent=1 // pred_region
      %342 = dma.done [#allocation5], 256
    $region49: #{tpu_custom_call.1} parent=1 // pred_fallthru
      _
    %343 = vsyncpa [#allocation4], 1
    %344 = vsyncpa [#allocation7], 1
    %345 = vsyncpa [#allocation5], 1

</llo_original>
